<compile_context>
chip_gen: v7x
topology: tpu7x:2x2x1
jax: 0.10.0
libtpu: 0.0.40
codegen_flags: <defaults>
</compile_context>

<pallas_src>
import functools
import math

import jax
import jax.numpy as jnp
from jax.experimental import pallas as pl
from jax.experimental.pallas import tpu as pltpu


# --------------------------------------------------------------------------
# Kernel
# --------------------------------------------------------------------------
def _resblock_kernel(x_ref, w1_ref, b1_ref, w2_ref, b2_ref, o_ref, *, mxu_dtype):
    # x_ref: (TM, lane)   w1_ref: (lane, h_lane)   b1_ref: (1, h_lane)
    # w2_ref: (h_lane, lane) b2_ref: (1, lane)     o_ref: (TM, lane)
    x = x_ref[...]
    x_f32 = x.astype(jnp.float32)              # residual path stays exact f32

    # MXU operands in bf16 (single-pass systolic matmul), f32 accumulation.
    h = jnp.dot(x.astype(mxu_dtype), w1_ref[...],
                preferred_element_type=jnp.float32) + b1_ref[...]
    h = jnp.where(h >= 0, h, 0.2 * h)          # LeakyReLU(0.2) on the VPU, f32

    y = jnp.dot(h.astype(mxu_dtype), w2_ref[...],
                preferred_element_type=jnp.float32) + b2_ref[...]
    y = jnp.where(y >= 0, y, 0.2 * y)

    o_ref[...] = (y + x_f32).astype(o_ref.dtype)


# --------------------------------------------------------------------------
# Tiling / VMEM planning
# --------------------------------------------------------------------------
def _vmem_capacity_bytes() -> int:
    try:
        cap = getattr(pltpu.get_tpu_info(), "vmem_capacity_bytes", None)
        if cap:
            return int(cap)
    except Exception:
        pass
    return 64 << 20  # conservative default (v7x per-TensorCore physical VMEM)


def _plan_tiles(m_rows, lane, h_lane, io_bytes, w_bytes):
    """Pick row-tile size + explicit VMEM limit (generation-aware)."""
    phys = _vmem_capacity_bytes()
    # Working-set budget: ~3/8 of physical VMEM, capped.
    #   v5e/v6e (128 MiB physical) -> 26 MiB; v7x (64 MiB per TC) -> 24 MiB.
    budget = min(max(phys * 3 // 8, 8 << 20), 26 << 20)

    # Fixed cost: double-buffered weight blocks + biases.  (pipeline_mode=
    # pl.Buffered(1) on the constant-index weight specs could halve this, but
    # it is <1 MiB here so we keep default buffering for lowering robustness.)
    fixed = 2 * (2 * lane * h_lane * w_bytes) + 2 * 4 * (lane + h_lane)

    # Per-row live bytes: double-buffered x/out tiles + every f32/bf16
    # intermediate, with 1.5x headroom so a bigger tm never spills/OOMs.
    per_row = (2 * lane * io_bytes      # x tile (2-deep pipeline)
               + 2 * lane * io_bytes    # out tile (2-deep pipeline)
               + 4 * lane               # x upcast to f32 (residual)
               + 2 * lane               # bf16 MXU copy of x
               + 4 * h_lane             # h (f32)
               + 2 * h_lane             # bf16 MXU copy of h
               + 4 * lane)              # y (f32)
    per_row = int(per_row * 1.5)

    avail = max(budget - fixed, 1 << 20)
    sub = 8 * max(1, 4 // io_bytes)     # sublane multiple: 8 (f32) / 16 (bf16)
    tm = max(sub, min(4096, (avail // per_row) // sub * sub))

    vmem_limit = int(min(max(budget * 5 // 4, 16 << 20), phys // 2))

    if m_rows <= tm:
        return m_rows, 1, vmem_limit
    return tm, pl.cdiv(m_rows, tm), vmem_limit


def _run_fused(x2d, params, *, mxu_dtype):
    """One pallas_call over a (rows, lane) slab, streaming the row dimension."""
    w1_blk, b1_blk, w2_blk, b2_blk = params
    m_rows, lane = x2d.shape
    h_lane = w1_blk.shape[1]
    io_bytes = jnp.dtype(x2d.dtype).itemsize
    w_bytes = jnp.dtype(w1_blk.dtype).itemsize
    block_rows, n_blocks, vmem_limit = _plan_tiles(
        m_rows, lane, h_lane, io_bytes, w_bytes)

    kernel = functools.partial(_resblock_kernel, mxu_dtype=mxu_dtype)
    return pl.pallas_call(
        kernel,
        out_shape=jax.ShapeDtypeStruct((m_rows, lane), x2d.dtype),
        grid=(n_blocks,),
        in_specs=[
            pl.BlockSpec((block_rows, lane), lambda i: (i, 0)),
            pl.BlockSpec((lane, h_lane), lambda i: (0, 0)),   # VMEM-resident
            pl.BlockSpec((1, h_lane), lambda i: (0, 0)),
            pl.BlockSpec((h_lane, lane), lambda i: (0, 0)),
            pl.BlockSpec((1, lane), lambda i: (0, 0)),
        ],
        out_specs=pl.BlockSpec((block_rows, lane), lambda i: (i, 0)),
        compiler_params=pltpu.CompilerParams(
            dimension_semantics=("parallel",),
            vmem_limit_bytes=vmem_limit,
        ),
    )(x2d, w1_blk, b1_blk, w2_blk, b2_blk)


# --------------------------------------------------------------------------
# Parameter packing (hoisted: runs once at build time, not per forward call)
# --------------------------------------------------------------------------
def _choose_pack(c_in, hidden, w_bytes, max_weight_bytes=4 << 20):
    # lane = lcm(C_in, 128): keeps loads/stores and the VPU path 128-lane dense
    # (unmasked vst).  Do NOT raise pack beyond this — block-diagonal MXU FLOPs
    # scale linearly with pack for zero memory-traffic benefit.
    pack = 128 // math.gcd(c_in, 128)
    if 2 * (pack * c_in) * (pack * hidden) * w_bytes > max_weight_bytes:
        return 1  # lane-sparse fallback: still correct, just lane-padded
    return pack


def _pack_params(w1, b1, w2, b2, pack, mxu_dtype):
    """Block-diagonal replicated weights/biases, built from PyTorch layouts."""
    hidden, c_in = w1.shape
    eye = jnp.eye(pack, dtype=jnp.float32)
    w1_blk = jnp.einsum("pq,hc->pcqh", eye, w1.astype(jnp.float32))
    w1_blk = w1_blk.reshape(pack * c_in, pack * hidden).astype(mxu_dtype)
    w2_blk = jnp.einsum("pq,ch->phqc", eye, w2.astype(jnp.float32))
    w2_blk = w2_blk.reshape(pack * hidden, pack * c_in).astype(mxu_dtype)
    b1_blk = jnp.tile(b1.astype(jnp.float32), pack).reshape(1, pack * hidden)
    b2_blk = jnp.tile(b2.astype(jnp.float32), pack).reshape(1, pack * c_in)
    return w1_blk, b1_blk, w2_blk, b2_blk


def make_smoothnet_resblock(w1, b1, w2, b2, *, mxu_dtype=jnp.bfloat16):
    """Precompute packed parameters once and return forward(x).

    w1: (H, C_in)  b1: (H,)  w2: (C_in, H)  b2: (C_in,)   (nn.Linear layouts)
    """
    hidden, c_in = w1.shape
    pack = _choose_pack(c_in, hidden, jnp.dtype(mxu_dtype).itemsize)
    lane = pack * c_in
    packed = _pack_params(w1, b1, w2, b2, pack, mxu_dtype)

    def forward(x):
        orig_shape = x.shape
        if orig_shape[-1] != c_in:
            raise ValueError(f"expected last dim {c_in}, got {orig_shape[-1]}")
        m = math.prod(orig_shape[:-1]) if len(orig_shape) > 1 else 1
        x2d = x.reshape(m, c_in)

        m_main = (m // pack) * pack
        tail = m - m_main

        parts = []
        if m_main > 0:
            x_main = x2d if tail == 0 else x2d[:m_main]
            # Free row-major reshape: pack `pack` consecutive samples per row.
            x_p = x_main.reshape(m_main // pack, lane)
            out_p = _run_fused(x_p, packed, mxu_dtype=mxu_dtype)
            parts.append(out_p.reshape(m_main, c_in))
        if tail > 0:
            # Pad only the <= pack-1 leftover rows up to one pack group (a few
            # hundred bytes) instead of padding + re-slicing the full tensor,
            # which would roughly double HBM traffic on this mem-bound op.
            x_t = jnp.pad(x2d[m_main:], ((0, pack - tail), (0, 0)))
            out_t = _run_fused(x_t.reshape(1, lane), packed, mxu_dtype=mxu_dtype)
            parts.append(out_t.reshape(pack, c_in)[:tail])

        out2d = parts[0] if len(parts) == 1 else jnp.concatenate(parts, axis=0)
        return out2d.reshape(orig_shape)

    return forward


# --------------------------------------------------------------------------
# References + self-test
# --------------------------------------------------------------------------
def _reference_f32(x, w1, b1, w2, b2):
    h = x @ w1.T + b1
    h = jnp.where(h >= 0, h, 0.2 * h)
    y = h @ w2.T + b2
    y = jnp.where(y >= 0, y, 0.2 * y)
    return y + x


def _reference_bf16(x, w1, b1, w2, b2):
    # Same math with bf16 MXU operands / f32 accumulation, mirroring the kernel.
    h = jnp.dot(x.astype(jnp.bfloat16), w1.T.astype(jnp.bfloat16),
                preferred_element_type=jnp.float32) + b1
    h = jnp.where(h >= 0, h, 0.2 * h)
    y = jnp.dot(h.astype(jnp.bfloat16), w2.T.astype(jnp.bfloat16),
                preferred_element_type=jnp.float32) + b2
    y = jnp.where(y >= 0, y, 0.2 * y)
    return y + x


if __name__ == "__main__":
    key = jax.random.PRNGKey(0)
    in_channels = 16
    hidden_channels = 32
    batch, seq = 2, 8  # x: (2, 8, 16) -> "(*, in_channels)"

    kx, k1, k2, k3, k4, kt = jax.random.split(key, 6)
    x = jax.random.normal(kx, (batch, seq, in_channels), dtype=jnp.float32)

    # deterministic synthetic parameters (nn.Linear shapes)
    w1 = 0.1 * jax.random.normal(k1, (hidden_channels, in_channels), dtype=jnp.float32)
    b1 = 0.1 * jax.random.normal(k2, (hidden_channels,), dtype=jnp.float32)
    w2 = 0.1 * jax.random.normal(k3, (in_channels, hidden_channels), dtype=jnp.float32)
    b2 = 0.1 * jax.random.normal(k4, (in_channels,), dtype=jnp.float32)

    forward = jax.jit(make_smoothnet_resblock(w1, b1, w2, b2))

    out = jax.block_until_ready(forward(x))
    assert out.shape == x.shape
    # structural check (bf16-operand reference, tight) + f32 numerical sanity
    assert jnp.allclose(out, _reference_bf16(x, w1, b1, w2, b2),
                        atol=1e-4, rtol=1e-4), "mismatch vs bf16 reference"
    assert jnp.allclose(out, _reference_f32(x, w1, b1, w2, b2),
                        atol=5e-2, rtol=5e-2), "mismatch vs f32 reference"

    # ragged row count: exercises the packed main path + small padded-tail path
    x_tail = jax.random.normal(kt, (3, 5, in_channels), dtype=jnp.float32)
    out_tail = jax.block_until_ready(forward(x_tail))
    assert out_tail.shape == x_tail.shape
    assert jnp.allclose(out_tail, _reference_bf16(x_tail, w1, b1, w2, b2),
                        atol=1e-4, rtol=1e-4), "mismatch vs bf16 reference (tail)"

    print("KERNEL_OK")
</pallas_src>

<mosaic_0001>
module attributes {stable_mosaic.version = 11 : i64} {
  func.func @_resblock_kernel(%arg0: i32, %arg1: memref<2x128xf32, #tpu.memory_space<vmem>>, %arg2: memref<128x256xbf16, #tpu.memory_space<vmem>>, %arg3: memref<1x256xf32, #tpu.memory_space<vmem>>, %arg4: memref<256x128xbf16, #tpu.memory_space<vmem>>, %arg5: memref<1x128xf32, #tpu.memory_space<vmem>>, %arg6: memref<2x128xf32, #tpu.memory_space<vmem>>) attributes {dimension_semantics = [#tpu.dimension_semantics<parallel>], iteration_bounds = array<i64: 1>, scalar_prefetch = 0 : i64, scratch_operands = 0 : i64, tpu.core_type = #tpu.core_type<tc>, window_params = [{transform_indices = @transform_0, window_bounds = array<i64: 2, 128>}, {pipeline_mode = #tpu.pipeline_mode<synchronous>, transform_indices = @transform_1, window_bounds = array<i64: 128, 256>}, {pipeline_mode = #tpu.pipeline_mode<synchronous>, transform_indices = @transform_2, window_bounds = array<i64: 1, 256>}, {pipeline_mode = #tpu.pipeline_mode<synchronous>, transform_indices = @transform_3, window_bounds = array<i64: 256, 128>}, {pipeline_mode = #tpu.pipeline_mode<synchronous>, transform_indices = @transform_4, window_bounds = array<i64: 1, 128>}, {transform_indices = @transform_5, window_bounds = array<i64: 2, 128>}]} {
    %c0 = arith.constant 0 : index
    %c0_0 = arith.constant 0 : index
    %0 = vector.load %arg1[%c0, %c0_0] : memref<2x128xf32, #tpu.memory_space<vmem>>, vector<2x128xf32>
    %1 = arith.truncf %0 : vector<2x128xf32> to vector<2x128xbf16>
    %c0_1 = arith.constant 0 : index
    %c0_2 = arith.constant 0 : index
    %2 = vector.load %arg2[%c0_1, %c0_2] : memref<128x256xbf16, #tpu.memory_space<vmem>>, vector<128x256xbf16>
    %cst = arith.constant dense<0.000000e+00> : vector<2x256xf32>
    %3 = tpu.matmul %1, %2, %cst {dimension_numbers = #tpu.dot_dimension_numbers<[1], [0], [0], [1], [0, 0, 1, 1], [], []>} : vector<2x128xbf16>, vector<128x256xbf16>, vector<2x256xf32> -> vector<2x256xf32>
    %c0_3 = arith.constant 0 : index
    %c0_4 = arith.constant 0 : index
    %4 = vector.load %arg3[%c0_3, %c0_4] : memref<1x256xf32, #tpu.memory_space<vmem>>, vector<1x256xf32>
    %5 = vector.broadcast %4 : vector<1x256xf32> to vector<2x256xf32>
    %6 = arith.addf %3, %5 : vector<2x256xf32>
    %cst_5 = arith.constant 0.000000e+00 : f32
    %7 = vector.broadcast %cst_5 : f32 to vector<2x256xf32>
    %8 = arith.cmpf oge, %6, %7 : vector<2x256xf32>
    %cst_6 = arith.constant 2.000000e-01 : f32
    %9 = vector.broadcast %cst_6 : f32 to vector<2x256xf32>
    %10 = arith.mulf %9, %6 : vector<2x256xf32>
    %11 = arith.select %8, %6, %10 : vector<2x256xi1>, vector<2x256xf32>
    %12 = arith.truncf %11 : vector<2x256xf32> to vector<2x256xbf16>
    %c0_7 = arith.constant 0 : index
    %c0_8 = arith.constant 0 : index
    %13 = vector.load %arg4[%c0_7, %c0_8] : memref<256x128xbf16, #tpu.memory_space<vmem>>, vector<256x128xbf16>
    %cst_9 = arith.constant dense<0.000000e+00> : vector<2x128xf32>
    %14 = tpu.matmul %12, %13, %cst_9 {dimension_numbers = #tpu.dot_dimension_numbers<[1], [0], [0], [1], [0, 0, 1, 1], [], []>} : vector<2x256xbf16>, vector<256x128xbf16>, vector<2x128xf32> -> vector<2x128xf32>
    %c0_10 = arith.constant 0 : index
    %c0_11 = arith.constant 0 : index
    %15 = vector.load %arg5[%c0_10, %c0_11] : memref<1x128xf32, #tpu.memory_space<vmem>>, vector<1x128xf32>
    %16 = vector.broadcast %15 : vector<1x128xf32> to vector<2x128xf32>
    %17 = arith.addf %14, %16 : vector<2x128xf32>
    %cst_12 = arith.constant 0.000000e+00 : f32
    %18 = vector.broadcast %cst_12 : f32 to vector<2x128xf32>
    %19 = arith.cmpf oge, %17, %18 : vector<2x128xf32>
    %cst_13 = arith.constant 2.000000e-01 : f32
    %20 = vector.broadcast %cst_13 : f32 to vector<2x128xf32>
    %21 = arith.mulf %20, %17 : vector<2x128xf32>
    %22 = arith.select %19, %17, %21 : vector<2x128xi1>, vector<2x128xf32>
    %23 = arith.addf %22, %0 : vector<2x128xf32>
    %c0_14 = arith.constant 0 : index
    %c0_15 = arith.constant 0 : index
    %24 = vector.load %arg6[%c0_14, %c0_15] : memref<2x128xf32, #tpu.memory_space<vmem>>, vector<2x128xf32>
    tpu.vector_store %arg6[%c0_14, %c0_15], %23 {strides = array<i32>} : memref<2x128xf32, #tpu.memory_space<vmem>>, vector<2x128xf32>,
    return
  }
  func.func @transform_0(%arg0: i32) -> (i32, i32) {
    %c0_i32 = arith.constant 0 : i32
    %c0_i32_0 = arith.constant 0 : i32
    return %arg0, %c0_i32 : i32, i32
  }
  func.func @transform_1(%arg0: i32) -> (i32, i32) {
    %c0_i32 = arith.constant 0 : i32
    %c0_i32_0 = arith.constant 0 : i32
    %c0_i32_1 = arith.constant 0 : i32
    return %c0_i32, %c0_i32_0 : i32, i32
  }
  func.func @transform_2(%arg0: i32) -> (i32, i32) {
    %c0_i32 = arith.constant 0 : i32
    %c0_i32_0 = arith.constant 0 : i32
    %c0_i32_1 = arith.constant 0 : i32
    return %c0_i32, %c0_i32_0 : i32, i32
  }
  func.func @transform_3(%arg0: i32) -> (i32, i32) {
    %c0_i32 = arith.constant 0 : i32
    %c0_i32_0 = arith.constant 0 : i32
    %c0_i32_1 = arith.constant 0 : i32
    return %c0_i32, %c0_i32_0 : i32, i32
  }
  func.func @transform_4(%arg0: i32) -> (i32, i32) {
    %c0_i32 = arith.constant 0 : i32
    %c0_i32_0 = arith.constant 0 : i32
    %c0_i32_1 = arith.constant 0 : i32
    return %c0_i32, %c0_i32_0 : i32, i32
  }
  func.func @transform_5(%arg0: i32) -> (i32, i32) {
    %c0_i32 = arith.constant 0 : i32
    %c0_i32_0 = arith.constant 0 : i32
    return %arg0, %c0_i32 : i32, i32
  }
}

</mosaic_0001>

<llo_original>
// kernel: forward.1
$region0: #{forward.1}
  #allocation0 [shape = 'u32[]', space=smem, size = 0x4, offset = 0x4, fixed_abs, tag = 'smem constant byte address 0x4 - core index']
  #allocation1 [shape = 'u32[144,128]{1,0:T(1,128)}', space=vmem, size = 0x12000, scoped, tag = 'internal scratch']
  %s0 = inlined_call_operand.vmem [shape: f32[2,128], index: 0, kind: input, shape index: {}]
  %s1 = inlined_call_operand.vmem [shape: bf16[128,256], index: 1, kind: input, shape index: {}]
  %s2 = inlined_call_operand.vmem [shape: f32[1,256], index: 2, kind: input, shape index: {}]
  %s3 = inlined_call_operand.vmem [shape: bf16[256,128], index: 3, kind: input, shape index: {}]
  %s4 = inlined_call_operand.vmem [shape: f32[1,128], index: 4, kind: input, shape index: {}]
  %s5 = inlined_call_operand.vmem [shape: f32[2,128], index: 5, kind: output, shape index: {}]
  %s6 = sld [smem:[#allocation0]]
  $region30: #{forward.1} parent=0
    _
  %s8 = ssub.s32 1, %s6
  %s9 = scalar_select 0, %s8, %s6
  // Predicated region
  $region2: #{forward.1} parent=0 // pred_check
    _
  $region3: #{forward.1} parent=0 // pred_check_branch
    %11 = sbr.rel (0) target = $region5
  $region4: #{forward.1} parent=0 // pred_region
    _
  $region5: #{forward.1} parent=0 // pred_fallthru
    _
  // Predicated region
  $region6: #{forward.1} parent=0 // pred_check
    _
  $region7: #{forward.1} parent=0 // pred_check_branch
    %13 = sbr.rel (0) target = $region9
  $region8: #{forward.1} parent=0 // pred_region
    _
  $region9: #{forward.1} parent=0 // pred_fallthru
    _
  // Predicated region
  $region10: #{forward.1} parent=0 // pred_check
    _
  $region11: #{forward.1} parent=0 // pred_check_branch
    %15 = sbr.rel (0) target = $region13
  $region12: #{forward.1} parent=0 // pred_region
    _
  $region13: #{forward.1} parent=0 // pred_fallthru
    _
  // Predicated region
  $region14: #{forward.1} parent=0 // pred_check
    _
  $region15: #{forward.1} parent=0 // pred_check_branch
    %17 = sbr.rel (0) target = $region17
  $region16: #{forward.1} parent=0 // pred_region
    _
  $region17: #{forward.1} parent=0 // pred_fallthru
    _
  // Predicated region
  $region18: #{forward.1} parent=0 // pred_check
    _
  $region19: #{forward.1} parent=0 // pred_check_branch
    %19 = sbr.rel (0) target = $region21
  $region20: #{forward.1} parent=0 // pred_region
    _
  $region21: #{forward.1} parent=0 // pred_fallthru
    _
  %v21 = vld [vmem:[%s0] sm:$0x3]
  %v22 = vpack.c.bf16 %v21, %v21
  %v23 = vld [vmem:[%s1] sm:$0xff]
  %v24 = vld [vmem:[%s1 + $0x8] sm:$0xff]
  %v25 = vld [vmem:[%s1 + $0x10] sm:$0xff]
  %v26 = vld [vmem:[%s1 + $0x18] sm:$0xff]
  %v27 = vld [vmem:[%s1 + $0x20] sm:$0xff]
  %v28 = vld [vmem:[%s1 + $0x28] sm:$0xff]
  %v29 = vld [vmem:[%s1 + $0x30] sm:$0xff]
  %v30 = vld [vmem:[%s1 + $0x38] sm:$0xff]
  %v31 = vld [vmem:[%s1 + $0x40] sm:$0xff]
  %v32 = vld [vmem:[%s1 + $0x48] sm:$0xff]
  %v33 = vld [vmem:[%s1 + $0x50] sm:$0xff]
  %v34 = vld [vmem:[%s1 + $0x58] sm:$0xff]
  %v35 = vld [vmem:[%s1 + $0x60] sm:$0xff]
  %v36 = vld [vmem:[%s1 + $0x68] sm:$0xff]
  %v37 = vld [vmem:[%s1 + $0x70] sm:$0xff]
  %v38 = vld [vmem:[%s1 + $0x78] sm:$0xff]
  %v39 = vld [vmem:[%s2] sm:$0x3]
  %v41 = vlaneseq
  %v42 = vshrl.u32 %v41, 7
  %v43 = vsub.s32 0, %v42
  %v44 = vrot.slane %v39, %v43
  %v45 = vlaneseq
  %v46 = vshrl.u32 %v45, 7
  %v47 = vsub.s32 1, %v46
  %v48 = vrot.slane %v39, %v47
  %v67 = vunpack.c.l.b16 %v23
  %v68 = vunpack.c.h.b16 %v23
  %v69 = vunpack.c.l.b16 %v24
  %v70 = vunpack.c.h.b16 %v24
  %v71 = vunpack.c.l.b16 %v25
  %v72 = vunpack.c.h.b16 %v25
  %v73 = vunpack.c.l.b16 %v26
  %v74 = vunpack.c.h.b16 %v26
  %v75 = vunpack.c.l.b16 %v27
  %v76 = vunpack.c.h.b16 %v27
  %v77 = vunpack.c.l.b16 %v28
  %v78 = vunpack.c.h.b16 %v28
  %v79 = vunpack.c.l.b16 %v29
  %v80 = vunpack.c.h.b16 %v29
  %v81 = vunpack.c.l.b16 %v30
  %v82 = vunpack.c.h.b16 %v30
  %v83 = vunpack.c.l.b16 %v31
  %v84 = vunpack.c.h.b16 %v31
  %v85 = vunpack.c.l.b16 %v32
  %v86 = vunpack.c.h.b16 %v32
  %v87 = vunpack.c.l.b16 %v33
  %v88 = vunpack.c.h.b16 %v33
  %v89 = vunpack.c.l.b16 %v34
  %v90 = vunpack.c.h.b16 %v34
  %v91 = vunpack.c.l.b16 %v35
  %v92 = vunpack.c.h.b16 %v35
  %v93 = vunpack.c.l.b16 %v36
  %v94 = vunpack.c.h.b16 %v36
  %v95 = vunpack.c.l.b16 %v37
  %v96 = vunpack.c.h.b16 %v37
  %v97 = vunpack.c.l.b16 %v38
  %v98 = vunpack.c.h.b16 %v38
  %v99 = vpack.c.b16 %v69, %v67
  %v100 = vpack.c.b16 %v70, %v68
  %v101 = vpack.c.b16 %v73, %v71
  %v102 = vpack.c.b16 %v74, %v72
  %v103 = vpack.c.b16 %v77, %v75
  %v104 = vpack.c.b16 %v78, %v76
  %v105 = vpack.c.b16 %v81, %v79
  %v106 = vpack.c.b16 %v82, %v80
  %v107 = vpack.c.b16 %v85, %v83
  %v108 = vpack.c.b16 %v86, %v84
  %v109 = vpack.c.b16 %v89, %v87
  %v110 = vpack.c.b16 %v90, %v88
  %v111 = vpack.c.b16 %v93, %v91
  %v112 = vpack.c.b16 %v94, %v92
  %v113 = vpack.c.b16 %v97, %v95
  %v114 = vpack.c.b16 %v98, %v96
  %131 = vmatprep.subr.bf16.mxu0 %v100
  %132 = vmatpush1.bf16.msra.mxu0 %v99
  %133 = vmatprep.subr.bf16.mxu0 %v102
  %134 = vmatpush1.bf16.msra.mxu0 %v101
  %135 = vmatprep.subr.bf16.mxu0 %v104
  %136 = vmatpush1.bf16.msra.mxu0 %v103
  %137 = vmatprep.subr.bf16.mxu0 %v106
  %138 = vmatpush1.bf16.msra.mxu0 %v105
  %139 = vmatprep.subr.bf16.mxu0 %v108
  %140 = vmatpush1.bf16.msra.mxu0 %v107
  %141 = vmatprep.subr.bf16.mxu0 %v110
  %142 = vmatpush1.bf16.msra.mxu0 %v109
  %143 = vmatprep.subr.bf16.mxu0 %v112
  %144 = vmatpush1.bf16.msra.mxu0 %v111
  %145 = vmatprep.subr.bf16.mxu0 %v114
  %146 = vmatpush1.bf16.msra.mxu0 %v113
  %147 = vmatprep.subr.bf16.mxu0 0
  %148 = vmatpush1.bf16.msra.mxu0 0
  %149 = vmatprep.subr.bf16.mxu0 0
  %150 = vmatpush1.bf16.msra.mxu0 0
  %151 = vmatprep.subr.bf16.mxu0 0
  %152 = vmatpush1.bf16.msra.mxu0 0
  %153 = vmatprep.subr.bf16.mxu0 0
  %154 = vmatpush1.bf16.msra.mxu0 0
  %155 = vmatprep.subr.bf16.mxu0 0
  %156 = vmatpush1.bf16.msra.mxu0 0
  %157 = vmatprep.subr.bf16.mxu0 0
  %158 = vmatpush1.bf16.msra.mxu0 0
  %159 = vmatprep.subr.bf16.mxu0 0
  %160 = vmatpush1.bf16.msra.mxu0 0
  %161 = vmatprep.subr.bf16.mxu0 0
  %162 = vmatpush1.bf16.msra.mxu0 0
  %163 = vmatprep.mubr.bf16.mxu0 0
  %164 = vmatmul.mubr.bf16.gmra.mrb[0].mxu0 %v22
  %v165 = vpop.f32.mrb[0].mxu0
  %v166 = vadd.f32 %v44, %v165
  %v167 = vpop.f32.mrb[0].mxu0
  %v168 = vadd.f32 %v48, %v167
  %v169 = vpop.f32.mrb[0].mxu0
  %v170 = vpop.f32.mrb[0].mxu0
  %171 = vdwg.mxu0
  %vm172 = vcmp.ge.f32.partialorder %v166, 0.0
  %vm173 = vcmp.ge.f32.partialorder %v168, 0.0
  %v174 = vmul.f32 %v166, 0.2
  %v175 = vmul.f32 %v168, 0.2
  %v176 = vsel %vm172, %v166, %v174
  %v177 = vsel %vm173, %v168, %v175
  %v178 = vpack.c.bf16 %v176, %v176
  %v179 = vpack.c.bf16 %v177, %v177
  %v180 = vld [vmem:[%s3] sm:$0xf]
  %v181 = vld [vmem:[%s3 + $0x4] sm:$0xf]
  %v182 = vld [vmem:[%s3 + $0x8] sm:$0xf]
  %v183 = vld [vmem:[%s3 + $0xc] sm:$0xf]
  %v184 = vld [vmem:[%s3 + $0x10] sm:$0xf]
  %v185 = vld [vmem:[%s3 + $0x14] sm:$0xf]
  %v186 = vld [vmem:[%s3 + $0x18] sm:$0xf]
  %v187 = vld [vmem:[%s3 + $0x1c] sm:$0xf]
  %v188 = vld [vmem:[%s3 + $0x20] sm:$0xf]
  %v189 = vld [vmem:[%s3 + $0x24] sm:$0xf]
  %v190 = vld [vmem:[%s3 + $0x28] sm:$0xf]
  %v191 = vld [vmem:[%s3 + $0x2c] sm:$0xf]
  %v192 = vld [vmem:[%s3 + $0x30] sm:$0xf]
  %v193 = vld [vmem:[%s3 + $0x34] sm:$0xf]
  %v194 = vld [vmem:[%s3 + $0x38] sm:$0xf]
  %v195 = vld [vmem:[%s3 + $0x3c] sm:$0xf]
  %v196 = vld [vmem:[%s3 + $0x40] sm:$0xf]
  %v197 = vld [vmem:[%s3 + $0x44] sm:$0xf]
  %v198 = vld [vmem:[%s3 + $0x48] sm:$0xf]
  %v199 = vld [vmem:[%s3 + $0x4c] sm:$0xf]
  %v200 = vld [vmem:[%s3 + $0x50] sm:$0xf]
  %v201 = vld [vmem:[%s3 + $0x54] sm:$0xf]
  %v202 = vld [vmem:[%s3 + $0x58] sm:$0xf]
  %v203 = vld [vmem:[%s3 + $0x5c] sm:$0xf]
  %v204 = vld [vmem:[%s3 + $0x60] sm:$0xf]
  %v205 = vld [vmem:[%s3 + $0x64] sm:$0xf]
  %v206 = vld [vmem:[%s3 + $0x68] sm:$0xf]
  %v207 = vld [vmem:[%s3 + $0x6c] sm:$0xf]
  %v208 = vld [vmem:[%s3 + $0x70] sm:$0xf]
  %v209 = vld [vmem:[%s3 + $0x74] sm:$0xf]
  %v210 = vld [vmem:[%s3 + $0x78] sm:$0xf]
  %v211 = vld [vmem:[%s3 + $0x7c] sm:$0xf]
  %v212 = vld [vmem:[%s4] sm:$0x1]
  %v214 = vlaneseq
  %v215 = vshrl.u32 %v214, 7
  %v216 = vsub.s32 0, %v215
  %v217 = vrot.slane %v212, %v216
  %v251 = vunpack.c.l.b16 %v180
  %v252 = vunpack.c.l.b16 %v181
  %v253 = vunpack.c.l.b16 %v182
  %v254 = vunpack.c.l.b16 %v183
  %v255 = vunpack.c.l.b16 %v184
  %v256 = vunpack.c.l.b16 %v185
  %v257 = vunpack.c.l.b16 %v186
  %v258 = vunpack.c.l.b16 %v187
  %v259 = vunpack.c.l.b16 %v188
  %v260 = vunpack.c.l.b16 %v189
  %v261 = vunpack.c.l.b16 %v190
  %v262 = vunpack.c.l.b16 %v191
  %v263 = vunpack.c.l.b16 %v192
  %v264 = vunpack.c.l.b16 %v193
  %v265 = vunpack.c.l.b16 %v194
  %v266 = vunpack.c.l.b16 %v195
  %v267 = vunpack.c.l.b16 %v196
  %v268 = vunpack.c.l.b16 %v197
  %v269 = vunpack.c.l.b16 %v198
  %v270 = vunpack.c.l.b16 %v199
  %v271 = vunpack.c.l.b16 %v200
  %v272 = vunpack.c.l.b16 %v201
  %v273 = vunpack.c.l.b16 %v202
  %v274 = vunpack.c.l.b16 %v203
  %v275 = vunpack.c.l.b16 %v204
  %v276 = vunpack.c.l.b16 %v205
  %v277 = vunpack.c.l.b16 %v206
  %v278 = vunpack.c.l.b16 %v207
  %v279 = vunpack.c.l.b16 %v208
  %v280 = vunpack.c.l.b16 %v209
  %v281 = vunpack.c.l.b16 %v210
  %v282 = vunpack.c.l.b16 %v211
  %v283 = vpack.c.b16 %v252, %v251
  %v284 = vpack.c.b16 %v254, %v253
  %v285 = vpack.c.b16 %v256, %v255
  %v286 = vpack.c.b16 %v258, %v257
  %v287 = vpack.c.b16 %v260, %v259
  %v288 = vpack.c.b16 %v262, %v261
  %v289 = vpack.c.b16 %v264, %v263
  %v290 = vpack.c.b16 %v266, %v265
  %v291 = vpack.c.b16 %v268, %v267
  %v292 = vpack.c.b16 %v270, %v269
  %v293 = vpack.c.b16 %v272, %v271
  %v294 = vpack.c.b16 %v274, %v273
  %v295 = vpack.c.b16 %v276, %v275
  %v296 = vpack.c.b16 %v278, %v277
  %v297 = vpack.c.b16 %v280, %v279
  %v298 = vpack.c.b16 %v282, %v281
  %315 = vmatprep.subr.bf16.mxu0 0
  %316 = vmatpush1.bf16.msra.mxu0 %v283
  %317 = vmatprep.subr.bf16.mxu0 0
  %318 = vmatpush1.bf16.msra.mxu0 %v284
  %319 = vmatprep.subr.bf16.mxu0 0
  %320 = vmatpush1.bf16.msra.mxu0 %v285
  %321 = vmatprep.subr.bf16.mxu0 0
  %322 = vmatpush1.bf16.msra.mxu0 %v286
  %323 = vmatprep.subr.bf16.mxu0 0
  %324 = vmatpush1.bf16.msra.mxu0 %v287
  %325 = vmatprep.subr.bf16.mxu0 0
  %326 = vmatpush1.bf16.msra.mxu0 %v288
  %327 = vmatprep.subr.bf16.mxu0 0
  %328 = vmatpush1.bf16.msra.mxu0 %v289
  %329 = vmatprep.subr.bf16.mxu0 0
  %330 = vmatpush1.bf16.msra.mxu0 %v290
  %331 = vmatprep.subr.bf16.mxu0 0
  %332 = vmatpush1.bf16.msra.mxu0 %v291
  %333 = vmatprep.subr.bf16.mxu0 0
  %334 = vmatpush1.bf16.msra.mxu0 %v292
  %335 = vmatprep.subr.bf16.mxu0 0
  %336 = vmatpush1.bf16.msra.mxu0 %v293
  %337 = vmatprep.subr.bf16.mxu0 0
  %338 = vmatpush1.bf16.msra.mxu0 %v294
  %339 = vmatprep.subr.bf16.mxu0 0
  %340 = vmatpush1.bf16.msra.mxu0 %v295
  %341 = vmatprep.subr.bf16.mxu0 0
  %342 = vmatpush1.bf16.msra.mxu0 %v296
  %343 = vmatprep.subr.bf16.mxu0 0
  %344 = vmatpush1.bf16.msra.mxu0 %v297
  %345 = vmatprep.subr.bf16.mxu0 0
  %346 = vmatpush1.bf16.msra.mxu0 %v298
  %347 = vmatprep.mubr.bf16.mxu0 %v179
  %348 = vmatmul.mubr.bf16.gmra.mrb[0].mxu0 %v178
  %v349 = vpop.f32.mrb[0].mxu0
  %v350 = vadd.f32 %v217, %v349
  %v351 = vpop.f32.mrb[0].mxu0
  %v352 = vpop.f32.mrb[0].mxu0
  %v353 = vpop.f32.mrb[0].mxu0
  %354 = vdwg.mxu0
  %vm355 = vcmp.ge.f32.partialorder %v350, 0.0
  %v356 = vmul.f32 %v350, 0.2
  %v357 = vsel %vm355, %v350, %v356
  %v358 = vadd.f32 %v357, %v21
  %359 = vst [vmem:[%s5] sm:$0x3] %v358
  // Predicated region
  $region22: #{forward.1} parent=0 // pred_check
    _
  $region23: #{forward.1} parent=0 // pred_check_branch
    %361 = sbr.rel (0) target = $region25
  $region24: #{forward.1} parent=0 // pred_region
    _
  $region25: #{forward.1} parent=0 // pred_fallthru
    _
  // Predicated region
  $region26: #{forward.1} parent=0 // pred_check
    _
  $region27: #{forward.1} parent=0 // pred_check_branch
    %363 = sbr.rel (0) target = $region29
  $region28: #{forward.1} parent=0 // pred_region
    _
  $region29: #{forward.1} parent=0 // pred_fallthru
    _

</llo_original>
